<compile_context>
chip_gen: v7x
topology: tpu7x:2x2x1
jax: 0.10.0
libtpu: 0.0.40
codegen_flags: <defaults>
</compile_context>

<pallas_src>
import jax
import jax.numpy as jnp
from jax.experimental import pallas as pl
from jax.experimental.pallas import tpu as pltpu


def _h_swish_kernel(x_ref, o_ref):
    # h_swish: x * relu6(x + 3) / 6   (multiply by 1/6 instead of divide)
    x = x_ref[...]
    o_ref[...] = x * (jnp.clip(x + 3.0, 0.0, 6.0) * (1.0 / 6.0))


def _round_up(a, b):
    return (a + b - 1) // b * b


def h_swish_pallas(x, *, lane_width=512, max_rows_per_block=512):
    """Elementwise h_swish via Pallas.  Accepts any shape / float dtype."""
    orig_shape = x.shape
    dtype = x.dtype
    flat = x.reshape(-1)
    total = flat.shape[0]

    # Lane-dense 2-D layout: (rows, lane_width) with lane_width a multiple of
    # 128 and the row-block a multiple of 8 -> unmasked vld/vst everywhere.
    rows_needed = pl.cdiv(total, lane_width)
    rows_per_block = min(max_rows_per_block, _round_up(max(rows_needed, 1), 8))
    padded_rows = _round_up(max(rows_needed, 1), rows_per_block)
    padded_total = padded_rows * lane_width
    if padded_total != total:
        flat = jnp.pad(flat, (0, padded_total - total))
    x2 = flat.reshape(padded_rows, lane_width)
    n_blocks = padded_rows // rows_per_block

    itemsize = jnp.dtype(dtype).itemsize
    cost = pl.CostEstimate(
        flops=5 * padded_total,              # add, 2x clip cmp/sel, 2x mul
        transcendentals=0,
        bytes_accessed=2 * padded_total * itemsize,
    )

    out2 = pl.pallas_call(
        _h_swish_kernel,
        out_shape=jax.ShapeDtypeStruct((padded_rows, lane_width), dtype),
        grid_spec=pltpu.PrefetchScalarGridSpec(
            num_scalar_prefetch=0,
            grid=(n_blocks,),
            in_specs=[pl.BlockSpec((rows_per_block, lane_width),
                                   lambda i: (i, 0))],
            out_specs=pl.BlockSpec((rows_per_block, lane_width),
                                   lambda i: (i, 0)),
        ),
        compiler_params=pltpu.CompilerParams(
            # single row-block axis; "parallel" lets v7x megacore shard it
            dimension_semantics=("parallel",),
            # explicit scoped-VMEM budget with headroom (blocks are ~1 MiB,
            # double-buffered in+out ~4 MiB) -- safe on v5e/v6e/v7x.
            vmem_limit_bytes=32 * 1024 * 1024,
        ),
        cost_estimate=cost,
    )(x2)

    return out2.reshape(-1)[:total].reshape(orig_shape)


def h_swish_ref(x):
    """Pure-JAX reference mirroring the PyTorch forward."""
    return x * (jnp.clip(x + 3.0, 0.0, 6.0) / 6.0)


if __name__ == "__main__":
    key = jax.random.PRNGKey(0)

    # Shapes consistent with how h_swish is used inside conv blocks:
    # batch=2, channels=4, spatial=16x16.
    x = jax.random.normal(key, (2, 4, 16, 16), jnp.float32)
    out = jax.block_until_ready(h_swish_pallas(x))
    ref = h_swish_ref(x)
    assert out.shape == x.shape
    assert jnp.allclose(out, ref, atol=1e-6, rtol=1e-6), "mismatch vs reference"

    # A small ragged shape to exercise the pad/unpad path.
    x2 = jax.random.normal(jax.random.fold_in(key, 1), (3, 5, 7, 11), jnp.float32)
    out2 = jax.block_until_ready(h_swish_pallas(x2))
    assert jnp.allclose(out2, h_swish_ref(x2), atol=1e-6, rtol=1e-6), \
        "mismatch vs reference (ragged shape)"

    print("KERNEL_OK")
</pallas_src>

<mosaic_0001>
module attributes {stable_mosaic.version = 11 : i64} {
  func.func @_h_swish_kernel(%arg0: i32, %arg1: memref<8x512xf32, #tpu.memory_space<vmem>>, %arg2: memref<8x512xf32, #tpu.memory_space<vmem>>) attributes {dimension_semantics = [#tpu.dimension_semantics<parallel>], iteration_bounds = array<i64: 1>, scalar_prefetch = 0 : i64, scratch_operands = 0 : i64, tpu.core_type = #tpu.core_type<tc>, window_params = [{transform_indices = @transform_0, window_bounds = array<i64: 8, 512>}, {transform_indices = @transform_1, window_bounds = array<i64: 8, 512>}]} {
    %c0 = arith.constant 0 : index
    %c0_0 = arith.constant 0 : index
    %0 = vector.load %arg1[%c0, %c0_0] : memref<8x512xf32, #tpu.memory_space<vmem>>, vector<8x512xf32>
    %cst = arith.constant 3.000000e+00 : f32
    %1 = vector.broadcast %cst : f32 to vector<8x512xf32>
    %2 = arith.addf %0, %1 : vector<8x512xf32>
    %cst_1 = arith.constant 0.000000e+00 : f32
    %cst_2 = arith.constant 6.000000e+00 : f32
    %3 = vector.broadcast %cst_1 : f32 to vector<8x512xf32>
    %4 = arith.maximumf %3, %2 : vector<8x512xf32>
    %5 = vector.broadcast %cst_2 : f32 to vector<8x512xf32>
    %6 = arith.minimumf %5, %4 : vector<8x512xf32>
    %cst_3 = arith.constant 0.166666672 : f32
    %7 = vector.broadcast %cst_3 : f32 to vector<8x512xf32>
    %8 = arith.mulf %6, %7 : vector<8x512xf32>
    %9 = arith.mulf %0, %8 : vector<8x512xf32>
    %c0_4 = arith.constant 0 : index
    %c0_5 = arith.constant 0 : index
    %10 = vector.load %arg2[%c0_4, %c0_5] : memref<8x512xf32, #tpu.memory_space<vmem>>, vector<8x512xf32>
    tpu.vector_store %arg2[%c0_4, %c0_5], %9 {strides = array<i32>} : memref<8x512xf32, #tpu.memory_space<vmem>>, vector<8x512xf32>,
    return
  }
  func.func @transform_0(%arg0: i32) -> (i32, i32) {
    %c0_i32 = arith.constant 0 : i32
    %c0_i32_0 = arith.constant 0 : i32
    return %arg0, %c0_i32 : i32, i32
  }
  func.func @transform_1(%arg0: i32) -> (i32, i32) {
    %c0_i32 = arith.constant 0 : i32
    %c0_i32_0 = arith.constant 0 : i32
    return %arg0, %c0_i32 : i32, i32
  }
}

</mosaic_0001>

<llo_original>
// kernel: tpu_custom_call.1
$region0: #{tpu_custom_call.1}
  #allocation0 [shape = 'u32[]', space=smem, size = 0x4, offset = 0x4, fixed_abs, tag = 'smem constant byte address 0x4 - core index']
  #allocation1 [shape = 'u32[144,128]{1,0:T(1,128)}', space=vmem, size = 0x12000, scoped, tag = 'internal scratch']
  %s0 = inlined_call_operand.hbm [shape: f32[8,512], index: 0, kind: input, shape index: {}]
  %s1 = inlined_call_operand.hbm [shape: f32[8,512], index: 1, kind: output, shape index: {}]
  %s2 = sld [smem:[#allocation0]]
  $region18: #{tpu_custom_call.1} parent=0
    _
  %s4 = ssub.s32 1, %s2
  %s5 = scalar_select 0, %s4, %s2
  $region1: #{tpu_custom_call.1} parent=0
    #allocation2 [shape = 'u8[16384]{0}', space=vmem, size = 0x4000, scoped, tag = 'input window, operand 0, single buffered']
    #allocation3 [shape = 's32[1]{0}', space=sflag, size = 0x4, scoped, tag = 'scoped memory for tpu_custom_call.1']
    #allocation4 [shape = 's32[1]{0}', space=sflag, size = 0x4, scoped, tag = 'scoped memory for tpu_custom_call.1']
    #allocation5 [shape = 'u8[16384]{0}', space=vmem, size = 0x4000, scoped, tag = 'output window, operand 0, single buffered']
    %6 = vsyncpa [#allocation3], 0
    %7 = vsyncpa [#allocation4], 0
    // Predicated region
    $region2: #{tpu_custom_call.1} parent=1 // pred_check
      _
    $region3: #{tpu_custom_call.1} parent=1 // pred_check_branch
      %9 = sbr.rel (0) target = $region5
    $region4: #{tpu_custom_call.1} parent=1 // pred_region
      %s11 = ssub.s32 512, 512
      %12 = vsyncadd [#allocation3], %s11
      %s14 = sshll.u32 [#allocation2], 4
      %s15 = int_to_ptr.vmem [resolvable:$true] %s14
      %17 = dma.hbm_to_vmem [thread:$0]  %s0, 512, %s15, [#allocation3]
    $region5: #{tpu_custom_call.1} parent=1 // pred_fallthru
      _
    // Predicated region
    $region6: #{tpu_custom_call.1} parent=1 // pred_check
      _
    $region7: #{tpu_custom_call.1} parent=1 // pred_check_branch
      %19 = sbr.rel (0) target = $region9
    $region8: #{tpu_custom_call.1} parent=1 // pred_region
      %20 = dma.done [#allocation3], 512
    $region9: #{tpu_custom_call.1} parent=1 // pred_fallthru
      _
    %v21 = vld [vmem:[#allocation2] sm:$0xff]
    %v22 = vld [vmem:[#allocation2 + $0x8] sm:$0xff]
    %v23 = vld [vmem:[#allocation2 + $0x10] sm:$0xff]
    %v24 = vld [vmem:[#allocation2 + $0x18] sm:$0xff]
    %v25 = vadd.f32 %v21, 3.0
    %v26 = vadd.f32 %v22, 3.0
    %v27 = vadd.f32 %v23, 3.0
    %v28 = vadd.f32 %v24, 3.0
    %v29 = vmax.f32 %v25, 0.0
    %v30 = vmax.f32 %v26, 0.0
    %v31 = vmax.f32 %v27, 0.0
    %v32 = vmax.f32 %v28, 0.0
    %v33 = vmin.f32 %v29, 6.0
    %v34 = vmin.f32 %v30, 6.0
    %v35 = vmin.f32 %v31, 6.0
    %v36 = vmin.f32 %v32, 6.0
    %v37 = vmul.f32 %v33, 0.16666667
    %v38 = vmul.f32 %v34, 0.16666667
    %v39 = vmul.f32 %v35, 0.16666667
    %v40 = vmul.f32 %v36, 0.16666667
    %v41 = vmul.f32 %v21, %v37
    %v42 = vmul.f32 %v22, %v38
    %v43 = vmul.f32 %v23, %v39
    %v44 = vmul.f32 %v24, %v40
    %45 = vst [vmem:[#allocation5] sm:$0xff] %v41
    %46 = vst [vmem:[#allocation5 + $0x8] sm:$0xff] %v42
    %47 = vst [vmem:[#allocation5 + $0x10] sm:$0xff] %v43
    %48 = vst [vmem:[#allocation5 + $0x18] sm:$0xff] %v44
    // Predicated region
    $region10: #{tpu_custom_call.1} parent=1 // pred_check
      _
    $region11: #{tpu_custom_call.1} parent=1 // pred_check_branch
      %50 = sbr.rel (0) target = $region13
    $region12: #{tpu_custom_call.1} parent=1 // pred_region
      %s52 = ssub.s32 512, 512
      %53 = vsyncadd [#allocation4], %s52
      %s55 = sshll.u32 [#allocation5], 4
      %s56 = int_to_ptr.vmem [resolvable:$true] %s55
      %58 = dma.vmem_to_hbm [thread:$0]  %s56, 512, %s1, [#allocation4]
    $region13: #{tpu_custom_call.1} parent=1 // pred_fallthru
      _
    // Predicated region
    $region14: #{tpu_custom_call.1} parent=1 // pred_check
      _
    $region15: #{tpu_custom_call.1} parent=1 // pred_check_branch
      %60 = sbr.rel (0) target = $region17
    $region16: #{tpu_custom_call.1} parent=1 // pred_region
      %61 = dma.done [#allocation4], 512
    $region17: #{tpu_custom_call.1} parent=1 // pred_fallthru
      _
    %62 = vsyncpa [#allocation3], 1
    %63 = vsyncpa [#allocation4], 1

</llo_original>
